<compile_context>
chip_gen: v6e
topology: v6e:2x2x1
jax: 0.10.0
libtpu: 0.0.40
codegen_flags: <defaults>
</compile_context>

<pallas_src>
import functools

import jax
import jax.numpy as jnp
from jax.experimental import pallas as pl
from jax.experimental.pallas import tpu as pltpu


def _remap_kernel(x_ref, o_ref, *, rmin, rdiff, compute_dtype):
    x = x_ref[...].astype(compute_dtype)
    # sigmoid lowers to EUP exp + reciprocal; affine remap runs on the VPU.
    y = (jax.nn.sigmoid(x) * jnp.asarray(rdiff, compute_dtype)
         + jnp.asarray(rmin, compute_dtype))
    o_ref[...] = y.astype(o_ref.dtype)


def remap(x: jax.Array, min_val: float, max_val: float,
          *, target_block_bytes: int = 2 * 1024 * 1024) -> jax.Array:
    """Applies y = sigmoid(x) * (max - min) + min elementwise via Pallas."""
    rdiff = float(max_val) - float(min_val)
    rmin = float(min_val)

    orig_shape = x.shape
    orig_dtype = x.dtype
    n = x.size

    # ---- lane-dense 2-D view --------------------------------------------
    # Widest lane multiple of 128 that divides n -> wide unmasked stores and
    # (for the common case) zero wrapper-side padding copies.
    lane = 128
    for cand in (1024, 512, 256, 128):
        if n % cand == 0:
            lane = cand
            break

    if n % lane == 0:
        pad = 0
        x2d = x.reshape(n // lane, lane)          # contiguous reshape, no copy
    else:
        # Ragged tail: pad by < 128 elements (instead of a full 8*128 round-up).
        pad = lane - (n % lane)
        x2d = jnp.pad(x.reshape(-1), (0, pad)).reshape((n + pad) // lane, lane)
    rows = (n + pad) // lane

    # ---- block sizing ----------------------------------------------------
    bytes_per_row = lane * x.dtype.itemsize
    tile_rows = max(1, target_block_bytes // bytes_per_row)
    # Multiple of 32 sublanes: valid tiling for f32 (8), bf16 (16), int8/fp8 (32).
    tile_rows = max(32, (tile_rows // 32) * 32)
    if tile_rows >= rows:
        # Whole (small) array in one block; block_shape == full array dims.
        tile_rows = rows
    # cdiv grid: last block may be partial; Pallas masks OOB writes, so no
    # divisibility fallback is needed and tile_rows stays large.
    grid = (pl.cdiv(rows, tile_rows),)

    compute_dtype = jnp.bfloat16 if orig_dtype == jnp.bfloat16 else jnp.float32

    kernel = functools.partial(_remap_kernel, rmin=rmin, rdiff=rdiff,
                               compute_dtype=compute_dtype)

    out = pl.pallas_call(
        kernel,
        out_shape=jax.ShapeDtypeStruct((rows, lane), orig_dtype),
        grid_spec=pltpu.PrefetchScalarGridSpec(
            num_scalar_prefetch=0,
            grid=grid,
            in_specs=[pl.BlockSpec((tile_rows, lane), lambda i: (i, 0))],
            out_specs=pl.BlockSpec((tile_rows, lane), lambda i: (i, 0)),
        ),
        compiler_params=pltpu.CompilerParams(
            dimension_semantics=("parallel",)),
    )(x2d)

    if pad:
        return out.reshape(-1)[:n].reshape(orig_shape)
    return out.reshape(orig_shape)


if __name__ == "__main__":
    key = jax.random.PRNGKey(0)
    # Module has no learned parameters; only (min, max) config.
    MIN_VAL, MAX_VAL = -2.0, 3.0

    x = jax.random.normal(key, (2, 4, 16, 16), dtype=jnp.float32)
    y = jax.block_until_ready(remap(x, MIN_VAL, MAX_VAL))

    # Reference in plain JAX (matches torch: x.sigmoid() * diff + min).
    y_ref = jax.nn.sigmoid(x) * (MAX_VAL - MIN_VAL) + MIN_VAL
    assert y.shape == x.shape and y.dtype == x.dtype
    assert jnp.allclose(y, y_ref, atol=1e-5, rtol=1e-5)

    # Extra sanity check: size not a multiple of 128 exercises the minimal-pad path.
    x2 = jax.random.normal(jax.random.PRNGKey(1), (2, 3, 7, 5), dtype=jnp.float32)
    y2 = jax.block_until_ready(remap(x2, MIN_VAL, MAX_VAL))
    y2_ref = jax.nn.sigmoid(x2) * (MAX_VAL - MIN_VAL) + MIN_VAL
    assert jnp.allclose(y2, y2_ref, atol=1e-5, rtol=1e-5)

    print("KERNEL_OK")
</pallas_src>

<mosaic_0001>
module attributes {stable_mosaic.version = 11 : i64} {
  func.func @_remap_kernel(%arg0: i32, %arg1: memref<2x1024xf32, #tpu.memory_space<vmem>>, %arg2: memref<2x1024xf32, #tpu.memory_space<vmem>>) attributes {dimension_semantics = [#tpu.dimension_semantics<parallel>], iteration_bounds = array<i64: 1>, scalar_prefetch = 0 : i64, scratch_operands = 0 : i64, tpu.core_type = #tpu.core_type<tc>, window_params = [{transform_indices = @transform_0, window_bounds = array<i64: 2, 1024>}, {transform_indices = @transform_1, window_bounds = array<i64: 2, 1024>}]} {
    %c0 = arith.constant 0 : index
    %c0_0 = arith.constant 0 : index
    %0 = vector.load %arg1[%c0, %c0_0] : memref<2x1024xf32, #tpu.memory_space<vmem>>, vector<2x1024xf32>
    %1 = arith.negf %0 : vector<2x1024xf32>
    %2 = math.exp %1 : vector<2x1024xf32>
    %cst = arith.constant 1.000000e+00 : f32
    %3 = vector.broadcast %cst : f32 to vector<2x1024xf32>
    %4 = arith.addf %3, %2 : vector<2x1024xf32>
    %5 = arith.divf %3, %4 : vector<2x1024xf32>
    %cst_1 = arith.constant 5.000000e+00 : f32
    %6 = vector.broadcast %cst_1 : f32 to vector<2x1024xf32>
    %7 = arith.mulf %5, %6 : vector<2x1024xf32>
    %cst_2 = arith.constant -2.000000e+00 : f32
    %8 = vector.broadcast %cst_2 : f32 to vector<2x1024xf32>
    %9 = arith.addf %7, %8 : vector<2x1024xf32>
    %c0_3 = arith.constant 0 : index
    %c0_4 = arith.constant 0 : index
    %10 = vector.load %arg2[%c0_3, %c0_4] : memref<2x1024xf32, #tpu.memory_space<vmem>>, vector<2x1024xf32>
    tpu.vector_store %arg2[%c0_3, %c0_4], %9 {strides = array<i32>} : memref<2x1024xf32, #tpu.memory_space<vmem>>, vector<2x1024xf32>,
    return
  }
  func.func @transform_0(%arg0: i32) -> (i32, i32) {
    %c0_i32 = arith.constant 0 : i32
    %c0_i32_0 = arith.constant 0 : i32
    return %arg0, %c0_i32 : i32, i32
  }
  func.func @transform_1(%arg0: i32) -> (i32, i32) {
    %c0_i32 = arith.constant 0 : i32
    %c0_i32_0 = arith.constant 0 : i32
    return %arg0, %c0_i32 : i32, i32
  }
}

</mosaic_0001>

<llo_original>
// kernel: tpu_custom_call.1
$region0: #{tpu_custom_call.1}
  #allocation0 [shape = 'u32[]', space=smem, size = 0x4, offset = 0x4, fixed_abs, tag = 'smem constant byte address 0x4 - core index']
  #allocation1 [shape = 'u32[144,128]{1,0:T(1,128)}', space=vmem, size = 0x12000, scoped, tag = 'internal scratch']
  %s0 = inlined_call_operand.hbm [shape: f32[2,1024], index: 0, kind: input, shape index: {}]
  %s1 = inlined_call_operand.hbm [shape: f32[2,1024], index: 1, kind: output, shape index: {}]
  %s2 = sld [smem:[#allocation0]]
  $region18: #{tpu_custom_call.1} parent=0
    _
  %s4 = ssub.s32 1, %s2
  %s5 = scalar_select 0, %s4, %s2
  $region1: #{tpu_custom_call.1} parent=0
    #allocation2 [shape = 'u8[8192]{0}', space=vmem, size = 0x2000, scoped, tag = 'input window, operand 0, single buffered']
    #allocation3 [shape = 's32[1]{0}', space=sflag, size = 0x4, scoped, tag = 'scoped memory for tpu_custom_call.1']
    #allocation4 [shape = 's32[1]{0}', space=sflag, size = 0x4, scoped, tag = 'scoped memory for tpu_custom_call.1']
    #allocation5 [shape = 'u8[8192]{0}', space=vmem, size = 0x2000, scoped, tag = 'output window, operand 0, single buffered']
    %6 = vsyncpa [#allocation3], 0
    %7 = vsyncpa [#allocation4], 0
    // Predicated region
    $region2: #{tpu_custom_call.1} parent=1 // pred_check
      _
    $region3: #{tpu_custom_call.1} parent=1 // pred_check_branch
      %9 = sbr.rel (0) target = $region5
    $region4: #{tpu_custom_call.1} parent=1 // pred_region
      %s11 = ssub.s32 256, 256
      %12 = vsyncadd [#allocation3], %s11
      %s14 = sshll.u32 [#allocation2], 4
      %s15 = int_to_ptr.vmem [resolvable:$true] %s14
      %17 = dma.hbm_to_vmem [thread:$0]  %s0, 256, %s15, [#allocation3]
    $region5: #{tpu_custom_call.1} parent=1 // pred_fallthru
      _
    // Predicated region
    $region6: #{tpu_custom_call.1} parent=1 // pred_check
      _
    $region7: #{tpu_custom_call.1} parent=1 // pred_check_branch
      %19 = sbr.rel (0) target = $region9
    $region8: #{tpu_custom_call.1} parent=1 // pred_region
      %20 = dma.done [#allocation3], 256
    $region9: #{tpu_custom_call.1} parent=1 // pred_fallthru
      _
    %v21 = vld [vmem:[#allocation2] sm:$0xff]
    %v22 = vld [vmem:[#allocation2 + $0x8] sm:$0xff]
    %v23 = vxor.u32 %v21, 2147483648
    %v24 = vxor.u32 %v22, 2147483648
    %v25 = vmul.f32 %v23, 1.442695
    %v26 = vpow.pop %v25
    %v27 = vmul.f32 %v24, 1.442695
    %v28 = vpow.pop %v27
    %v29 = vadd.f32 %v26, 1.0
    %v30 = vadd.f32 %v28, 1.0
    %v31 = vrcp.pop %v29
    %v32 = vmul.f32 1.0, %v31
    %v33 = vrcp.pop %v30
    %v34 = vmul.f32 1.0, %v33
    %v35 = vmul.f32 %v32, 5.0
    %v36 = vmul.f32 %v34, 5.0
    %v37 = vadd.f32 %v35, -2.0
    %v38 = vadd.f32 %v36, -2.0
    %39 = vst [vmem:[#allocation5] sm:$0xff] %v37
    %40 = vst [vmem:[#allocation5 + $0x8] sm:$0xff] %v38
    // Predicated region
    $region10: #{tpu_custom_call.1} parent=1 // pred_check
      _
    $region11: #{tpu_custom_call.1} parent=1 // pred_check_branch
      %42 = sbr.rel (0) target = $region13
    $region12: #{tpu_custom_call.1} parent=1 // pred_region
      %s44 = ssub.s32 256, 256
      %45 = vsyncadd [#allocation4], %s44
      %s47 = sshll.u32 [#allocation5], 4
      %s48 = int_to_ptr.vmem [resolvable:$true] %s47
      %50 = dma.vmem_to_hbm [thread:$0]  %s48, 256, %s1, [#allocation4]
    $region13: #{tpu_custom_call.1} parent=1 // pred_fallthru
      _
    // Predicated region
    $region14: #{tpu_custom_call.1} parent=1 // pred_check
      _
    $region15: #{tpu_custom_call.1} parent=1 // pred_check_branch
      %52 = sbr.rel (0) target = $region17
    $region16: #{tpu_custom_call.1} parent=1 // pred_region
      %53 = dma.done [#allocation4], 256
    $region17: #{tpu_custom_call.1} parent=1 // pred_fallthru
      _
    %54 = vsyncpa [#allocation3], 1
    %55 = vsyncpa [#allocation4], 1

</llo_original>
